<compile_context>
chip_gen: v7x
topology: tpu7x:2x2x1
jax: 0.10.0
libtpu: 0.0.40
codegen_flags: <defaults>
</compile_context>

<pallas_src>
import jax
import jax.numpy as jnp
from jax.experimental import pallas as pl
from jax.experimental.pallas import tpu as pltpu

EPS = 1e-6


def _layernorm_kernel(alpha_ref, bias_ref, x_ref, o_ref):
    # x_ref block: (TR, D); normalize over the last (lane) axis.
    x = x_ref[...].astype(jnp.float32)
    d = x.shape[-1]

    # Scalar params read exactly once per grid step (hoisted out of tile math).
    alpha = alpha_ref[0]
    bias = bias_ref[0]

    # Centered two-pass statistics: exact, no cancellation risk. The kernel is
    # HBM-bound with large VALU/XLU slack, so the extra full-tile subtract and
    # multiply are free in wall-clock.
    mean = jnp.sum(x, axis=-1, keepdims=True) * (1.0 / d)
    diff = x - mean
    var = jnp.sum(diff * diff, axis=-1, keepdims=True) * (1.0 / (d - 1))
    std = jnp.sqrt(var)

    # Fold alpha into a per-row (TR, 1) scale: one narrow exact divide per row
    # instead of a full-tile divide (and no approximate reciprocal -> exact).
    scale = alpha / (std + EPS)
    o_ref[...] = (diff * scale + bias).astype(o_ref.dtype)


def layer_norm_pallas(x, alpha, bias):
    """LayerNormalization over the last axis of x; alpha/bias: shape-(1,)."""
    orig_shape = x.shape
    D = orig_shape[-1]
    assert D > 1, "d_model must be > 1 for the unbiased std (ddof=1)"

    rows = 1
    for s in orig_shape[:-1]:
        rows *= s
    x2 = x.reshape(rows, D)

    # --- Row-tile sizing (dtype-aware, generation-friendly) -----------------
    # ~6 MiB HBM-side block: in+out double-buffered (~24 MiB) plus in-kernel
    # f32 temporaries stays under the 48 MiB VMEM limit even on v7x (64 MiB
    # physical), while being large enough to run v5e/v6e/v7x near the HBM
    # roofline instead of paying per-grid-step overhead on tiny tiles.
    itemsize = jnp.dtype(x.dtype).itemsize
    block_budget_bytes = 6 * 1024 * 1024
    tr = max(8, (block_budget_bytes // (D * itemsize)) // 8 * 8)
    # Guarantee at least 2 row tiles so the "parallel" grid axis can shard
    # across v7x's two TensorCores (costs nothing on single-TC v5e/v6e).
    if rows > 8:
        tr_half = max(8, ((-(-rows // 2)) + 7) // 8 * 8)
        tr = min(tr, tr_half)
    # Never larger than the (sublane-rounded) row count.
    TR = min(tr, max(8, ((rows + 7) // 8) * 8))

    # No wrapper-side padding/slicing: a ragged last block (rows % TR != 0) is
    # handled by Pallas (OOB reads are discarded rows; OOB writes are masked).
    num_tiles = pl.cdiv(rows, TR)

    out = pl.pallas_call(
        _layernorm_kernel,
        out_shape=jax.ShapeDtypeStruct((rows, D), x.dtype),
        grid_spec=pltpu.PrefetchScalarGridSpec(
            num_scalar_prefetch=0,
            grid=(num_tiles,),
            in_specs=[
                pl.BlockSpec(memory_space=pltpu.SMEM),  # alpha
                pl.BlockSpec(memory_space=pltpu.SMEM),  # bias
                pl.BlockSpec((TR, D), lambda i: (i, 0)),
            ],
            out_specs=pl.BlockSpec((TR, D), lambda i: (i, 0)),
        ),
        compiler_params=pltpu.CompilerParams(
            dimension_semantics=("parallel",),
            vmem_limit_bytes=48 * 1024 * 1024,
        ),
    )(alpha, bias, x2)

    return out.reshape(orig_shape)


def decoder_forward(x, encoder_output, src_mask, tgt_mask, layers, alpha, bias):
    """Mirrors Decoder.forward: apply each layer, then LayerNormalization."""
    # TODO(synk): decoder layers are externally supplied nn.Modules with no
    # definition in the reference; the stack is treated as identity here.
    for layer in layers:
        x = layer(x, encoder_output, src_mask, tgt_mask)
    return layer_norm_pallas(x, alpha, bias)


if __name__ == "__main__":
    key = jax.random.PRNGKey(0)
    B, S, D = 2, 8, 128  # batch, target seq, d_model (lane-aligned)
    S_src = 8

    kx, ke = jax.random.split(key)
    x = jax.random.normal(kx, (B, S, D), dtype=jnp.float32)
    encoder_output = jax.random.normal(ke, (B, S_src, D), dtype=jnp.float32)
    src_mask = jnp.ones((B, 1, S, S_src), dtype=jnp.float32)
    tgt_mask = jnp.tril(jnp.ones((S, S), dtype=jnp.float32))[None, None]

    # LayerNormalization params, deterministic init as in the module:
    alpha = jnp.ones((1,), dtype=jnp.float32)   # nn.Parameter(torch.ones(1))
    bias = jnp.zeros((1,), dtype=jnp.float32)   # nn.Parameter(torch.zeros(1))

    out = decoder_forward(x, encoder_output, src_mask, tgt_mask,
                          layers=(), alpha=alpha, bias=bias)
    out = jax.block_until_ready(out)

    # sanity check against a pure-JAX reference of the same math
    mean = jnp.mean(x, axis=-1, keepdims=True)
    std = jnp.sqrt(jnp.sum((x - mean) ** 2, axis=-1, keepdims=True) / (D - 1))
    ref = alpha[0] * (x - mean) / (std + EPS) + bias[0]
    err = float(jnp.max(jnp.abs(out - ref)))
    assert jnp.allclose(out, ref, atol=1e-4, rtol=1e-4), err

    print("KERNEL_OK")
</pallas_src>

<mosaic_0001>
module attributes {stable_mosaic.version = 11 : i64} {
  func.func @_layernorm_kernel(%arg0: i32, %arg1: memref<1xf32, #tpu.memory_space<smem>>, %arg2: memref<1xf32, #tpu.memory_space<smem>>, %arg3: memref<8x128xf32, #tpu.memory_space<vmem>>, %arg4: memref<8x128xf32, #tpu.memory_space<vmem>>) attributes {dimension_semantics = [#tpu.dimension_semantics<parallel>], iteration_bounds = array<i64: 2>, scalar_prefetch = 0 : i64, scratch_operands = 0 : i64, tpu.core_type = #tpu.core_type<tc>, window_params = [{transform_indices = @transform_0, window_bounds = array<i64: 1>}, {transform_indices = @transform_1, window_bounds = array<i64: 1>}, {transform_indices = @transform_2, window_bounds = array<i64: 8, 128>}, {transform_indices = @transform_3, window_bounds = array<i64: 8, 128>}]} {
    %c0 = arith.constant 0 : index
    %c0_0 = arith.constant 0 : index
    %0 = vector.load %arg3[%c0, %c0_0] : memref<8x128xf32, #tpu.memory_space<vmem>>, vector<8x128xf32>
    %c0_1 = arith.constant 0 : index
    %1 = memref.load %arg1[%c0_1] : memref<1xf32, #tpu.memory_space<smem>>
    %c0_2 = arith.constant 0 : index
    %2 = memref.load %arg2[%c0_2] : memref<1xf32, #tpu.memory_space<smem>>
    %cst = arith.constant dense<0.000000e+00> : vector<8xf32>
    %3 = vector.multi_reduction <add>, %0, %cst [1] : vector<8x128xf32> to vector<8xf32>
    %4 = vector.shape_cast %3 : vector<8xf32> to vector<8x1xf32>
    %cst_3 = arith.constant 7.812500e-03 : f32
    %5 = vector.broadcast %cst_3 : f32 to vector<8x1xf32>
    %6 = arith.mulf %4, %5 : vector<8x1xf32>
    %7 = vector.broadcast %6 : vector<8x1xf32> to vector<8x128xf32>
    %8 = arith.subf %0, %7 : vector<8x128xf32>
    %9 = arith.mulf %8, %8 : vector<8x128xf32>
    %cst_4 = arith.constant dense<0.000000e+00> : vector<8xf32>
    %10 = vector.multi_reduction <add>, %9, %cst_4 [1] : vector<8x128xf32> to vector<8xf32>
    %11 = vector.shape_cast %10 : vector<8xf32> to vector<8x1xf32>
    %cst_5 = arith.constant 0.00787401571 : f32
    %12 = vector.broadcast %cst_5 : f32 to vector<8x1xf32>
    %13 = arith.mulf %11, %12 : vector<8x1xf32>
    %14 = math.sqrt %13 : vector<8x1xf32>
    %cst_6 = arith.constant 9.99999997E-7 : f32
    %15 = vector.broadcast %cst_6 : f32 to vector<8x1xf32>
    %16 = arith.addf %14, %15 : vector<8x1xf32>
    %17 = vector.broadcast %1 : f32 to vector<8x1xf32>
    %18 = arith.divf %17, %16 : vector<8x1xf32>
    %19 = vector.broadcast %18 : vector<8x1xf32> to vector<8x128xf32>
    %20 = arith.mulf %8, %19 : vector<8x128xf32>
    %21 = vector.broadcast %2 : f32 to vector<8x128xf32>
    %22 = arith.addf %20, %21 : vector<8x128xf32>
    %c0_7 = arith.constant 0 : index
    %c0_8 = arith.constant 0 : index
    %23 = vector.load %arg4[%c0_7, %c0_8] : memref<8x128xf32, #tpu.memory_space<vmem>>, vector<8x128xf32>
    tpu.vector_store %arg4[%c0_7, %c0_8], %22 {strides = array<i32>} : memref<8x128xf32, #tpu.memory_space<vmem>>, vector<8x128xf32>,
    return
  }
  func.func @transform_0(%arg0: i32) -> i32 {
    %c0_i32 = arith.constant 0 : i32
    %c0_i32_0 = arith.constant 0 : i32
    return %c0_i32 : i32
  }
  func.func @transform_1(%arg0: i32) -> i32 {
    %c0_i32 = arith.constant 0 : i32
    %c0_i32_0 = arith.constant 0 : i32
    return %c0_i32 : i32
  }
  func.func @transform_2(%arg0: i32) -> (i32, i32) {
    %c0_i32 = arith.constant 0 : i32
    %c0_i32_0 = arith.constant 0 : i32
    return %arg0, %c0_i32 : i32, i32
  }
  func.func @transform_3(%arg0: i32) -> (i32, i32) {
    %c0_i32 = arith.constant 0 : i32
    %c0_i32_0 = arith.constant 0 : i32
    return %arg0, %c0_i32 : i32, i32
  }
}

</mosaic_0001>

<llo_original>
// kernel: tpu_custom_call.1
$region0: #{tpu_custom_call.1}
  #allocation0 [shape = 'u32[]', space=smem, size = 0x4, offset = 0x4, fixed_abs, tag = 'smem constant byte address 0x4 - core index']
  #allocation1 [shape = 'u32[144,128]{1,0:T(1,128)}', space=vmem, size = 0x12000, scoped, tag = 'internal scratch']
  #allocation2 [shape = 'f32[1]{0:T(128)S(6)}', space=smem, size = 0x200, scoped, tag = 'scoped memory for tpu_custom_call.1']
  #allocation3 [shape = 'f32[1]{0:T(128)S(6)}', space=smem, size = 0x200, scoped, tag = 'scoped memory for tpu_custom_call.1']
  %s0 = inlined_call_operand.<no memory space> [shape: f32[1], index: 0, kind: input, shape index: {}]
  %s1 = inlined_call_operand.<no memory space> [shape: f32[1], index: 1, kind: input, shape index: {}]
  %s2 = inlined_call_operand.hbm [shape: f32[16,128], index: 2, kind: input, shape index: {}]
  %s3 = inlined_call_operand.hbm [shape: f32[16,128], index: 3, kind: output, shape index: {}]
  %s4 = sld [smem:[#allocation0]]
  $region49: #{tpu_custom_call.1} parent=0
    _
  %s6 = ssub.s32 1, %s4
  %s7 = scalar_select 0, %s6, %s4
  %8 = sst [smem:[#allocation2]] %s0
  %9 = sst [smem:[#allocation3]] %s1
  $region1: #{tpu_custom_call.1} parent=0
    #allocation4 [shape = 'u8[8192]{0}', space=vmem, size = 0x2000, scoped, tag = 'input window, operand 2']
    #allocation5 [shape = 's32[2]{0}', space=sflag, size = 0x8, scoped, tag = 'scoped memory for tpu_custom_call.1']
    #allocation6 [shape = 's32[2]{0}', space=sflag, size = 0x8, scoped, tag = 'scoped memory for tpu_custom_call.1']
    #allocation7 [shape = 'u8[8192]{0}', space=vmem, size = 0x2000, scoped, tag = 'output window, operand 0']
    %10 = vsyncpa [#allocation5], 0
    %s11 = scalar_lea.sflag [#allocation5], 1
    %12 = vsyncpa %s11, 0
    %13 = vsyncpa [#allocation6], 0
    %s14 = scalar_lea.sflag [#allocation6], 1
    %15 = vsyncpa %s14, 0
    loop: start=0, step=1, limit=4
    $region2: #{tpu_custom_call.1} parent=1 // loop_pre_header
      _
    $region3: #{tpu_custom_call.1} parent=1 // loop_header
      %s17 = sphi 0, %s21
      %p18 = scmp.ge.s32.totalorder %s17, 4
      %s25 = sphi 0, %s25
      %s27 = sphi 0, %s25
      %s28 = sphi 0, %s27
      %s42 = sphi 0, %s28
      %s46 = sphi 0, %s46
      %s48 = sphi 0, %s46
      %s49 = sphi 0, %s48
      %s63 = sphi 0, %s49
      %s69 = sphi 0, %s71
      %s72 = sphi 0, %s69
      %s73 = sphi 0, %s72
      %s89 = sphi 0, %s73
      %s95 = sphi 0, %s97
      %s98 = sphi 0, %s95
      %s99 = sphi 0, %s98
      %s115 = sphi 0, %s99
    $region4: #{tpu_custom_call.1} parent=1 // loop_header_branch
      %20 = sbr.rel (%p18) target = $region8
    $region5: #{tpu_custom_call.1} parent=1 // loop_body
      %s22 = ssub.s32 %s17, 1
      %s23 = ssub.s32 %s17, 2
      %s24 = sadd.s32 %s17, 1
      %s26 = sadd.s32 %s25, 1
      %p29 = scmp.eq.s32.totalorder %s17, 1
      %p30 = scmp.ne.s32.totalorder %s25, %s27
      %p31 = scmp.eq.s32.totalorder %s17, 0
      %p32 = por %p30, %p31
      %p33 = scmp.ne.s32.totalorder %s25, %s27
      %p34 = scmp.eq.s32.totalorder %s22, 1
      %p35 = por %p33, %p34
      %p36 = scmp.ne.s32.totalorder %s27, %s28
      %p37 = scmp.eq.s32.totalorder %s22, 0
      %p38 = por %p36, %p37
      %p39 = scmp.ne.s32.totalorder %s27, %s28
      %p40 = scmp.eq.s32.totalorder %s23, 1
      %p41 = por %p39, %p40
      %p43 = scmp.ne.s32.totalorder %s28, %s42
      %p44 = scmp.eq.s32.totalorder %s23, 0
      %p45 = por %p43, %p44
      %s47 = sadd.s32 %s46, 1
      %p50 = scmp.eq.s32.totalorder %s17, 1
      %p51 = scmp.ne.s32.totalorder %s46, %s48
      %p52 = scmp.eq.s32.totalorder %s17, 0
      %p53 = por %p51, %p52
      %p54 = scmp.ne.s32.totalorder %s46, %s48
      %p55 = scmp.eq.s32.totalorder %s22, 1
      %p56 = por %p54, %p55
      %p57 = scmp.ne.s32.totalorder %s48, %s49
      %p58 = scmp.eq.s32.totalorder %s22, 0
      %p59 = por %p57, %p58
      %p60 = scmp.ne.s32.totalorder %s48, %s49
      %p61 = scmp.eq.s32.totalorder %s23, 1
      %p62 = por %p60, %p61
      %p64 = scmp.ne.s32.totalorder %s49, %s63
      %p65 = scmp.eq.s32.totalorder %s23, 0
      %p66 = por %p64, %p65
      %s67 = ssub.s32 %s17, %s24
      %p68 = scmp.eq.s32.totalorder %s67, 0
      %s70 = sadd.s32 %s69, 1
      %s71 = scalar_select %p68, %s69, %s70
      %p74 = pneg %p68
      %p75 = scmp.eq.s32.totalorder %s17, 1
      %p76 = por %p74, %p75
      %p77 = scmp.ne.s32.totalorder %s69, %s72
      %p78 = scmp.eq.s32.totalorder %s17, 0
      %p79 = por %p77, %p78
      %p80 = scmp.ne.s32.totalorder %s69, %s72
      %p81 = scmp.eq.s32.totalorder %s22, 1
      %p82 = por %p80, %p81
      %p83 = scmp.ne.s32.totalorder %s72, %s73
      %p84 = scmp.eq.s32.totalorder %s22, 0
      %p85 = por %p83, %p84
      %p86 = scmp.ne.s32.totalorder %s72, %s73
      %p87 = scmp.eq.s32.totalorder %s23, 1
      %p88 = por %p86, %p87
      %p90 = scmp.ne.s32.totalorder %s73, %s89
      %p91 = scmp.eq.s32.totalorder %s23, 0
      %p92 = por %p90, %p91
      %s93 = ssub.s32 %s17, %s24
      %p94 = scmp.eq.s32.totalorder %s93, 0
      %s96 = sadd.s32 %s95, 1
      %s97 = scalar_select %p94, %s95, %s96
      %p100 = pneg %p94
      %p101 = scmp.eq.s32.totalorder %s17, 1
      %p102 = por %p100, %p101
      %p103 = scmp.ne.s32.totalorder %s95, %s98
      %p104 = scmp.eq.s32.totalorder %s17, 0
      %p105 = por %p103, %p104
      %p106 = scmp.ne.s32.totalorder %s95, %s98
      %p107 = scmp.eq.s32.totalorder %s22, 1
      %p108 = por %p106, %p107
      %p109 = scmp.ne.s32.totalorder %s98, %s99
      %p110 = scmp.eq.s32.totalorder %s22, 0
      %p111 = por %p109, %p110
      %p112 = scmp.ne.s32.totalorder %s98, %s99
      %p113 = scmp.eq.s32.totalorder %s23, 1
      %p114 = por %p112, %p113
      %p116 = scmp.ne.s32.totalorder %s99, %s115
      %p117 = scmp.eq.s32.totalorder %s23, 0
      %p118 = por %p116, %p117
      %p119 = scmp.le.s32.totalorder 1, %s17
      %p120 = scmp.lt.s32.totalorder %s17, 3
      %p121 = pnand %p119, %p120
      %p122 = pneg %p121
      // Predicated region
      $region9: #{tpu_custom_call.1} parent=5 // pred_check
        _
      $region10: #{tpu_custom_call.1} parent=5 // pred_check_branch
        %124 = sbr.rel (%p121) target = $region12
      $region11: #{tpu_custom_call.1} parent=5 // pred_region
        %s125 = ssub.s32 %s17, 1
        // Predicated region
        $region13: #{tpu_custom_call.1} parent=11 // pred_check
          %p126 = pneg %p38
        $region14: #{tpu_custom_call.1} parent=11 // pred_check_branch
          %128 = sbr.rel (%p126) target = $region16
        $region15: #{tpu_custom_call.1} parent=11 // pred_region
          _
        $region16: #{tpu_custom_call.1} parent=11 // pred_fallthru
          _
        // Predicated region
        $region17: #{tpu_custom_call.1} parent=11 // pred_check
          %p129 = pneg %p59
        $region18: #{tpu_custom_call.1} parent=11 // pred_check_branch
          %131 = sbr.rel (%p129) target = $region20
        $region19: #{tpu_custom_call.1} parent=11 // pred_region
          _
        $region20: #{tpu_custom_call.1} parent=11 // pred_fallthru
          _
      $region12: #{tpu_custom_call.1} parent=5 // pred_fallthru
        _
      %p132 = scmp.lt.s32.totalorder %s17, 2
      // Predicated region
      $region21: #{tpu_custom_call.1} parent=5 // pred_check
        %p133 = pneg %p132
      $region22: #{tpu_custom_call.1} parent=5 // pred_check_branch
        %135 = sbr.rel (%p133) target = $region24
      $region23: #{tpu_custom_call.1} parent=5 // pred_region
        // Predicated region
        $region25: #{tpu_custom_call.1} parent=23 // pred_check
          %p136 = pneg %p79
        $region26: #{tpu_custom_call.1} parent=23 // pred_check_branch
          %138 = sbr.rel (%p136) target = $region28
        $region27: #{tpu_custom_call.1} parent=23 // pred_region
          %s139 = sand.u32 %s69, 1
          %s140 = scalar_lea.sflag [#allocation5], %s139
          %s141 = sand.u32 %s69, 1
          %s142 = smul.addr %s141, 8
          %s143 = scalar_lea.vmem [#allocation4], %s142
          %s145 = ssub.s32 128, 128
          %146 = vsyncadd %s140, %s145
          %s147 = smul.addr %s17, 128
          %s148 = scalar_lea.hbm %s2, %s147
          %s150 = sshll.u32 %s143, 4
          %s151 = int_to_ptr.vmem [resolvable:$true] %s150
          %153 = dma.hbm_to_vmem [thread:$0]  %s148, 128, %s151, %s140
        $region28: #{tpu_custom_call.1} parent=23 // pred_fallthru
          _
      $region24: #{tpu_custom_call.1} parent=5 // pred_fallthru
        _
      %p154 = scmp.le.s32.totalorder 1, %s17
      %p155 = scmp.lt.s32.totalorder %s17, 3
      %p156 = pnand %p154, %p155
      %p157 = pneg %p156
      // Predicated region
      $region29: #{tpu_custom_call.1} parent=5 // pred_check
        _
      $region30: #{tpu_custom_call.1} parent=5 // pred_check_branch
        %159 = sbr.rel (%p156) target = $region32
      $region31: #{tpu_custom_call.1} parent=5 // pred_region
        %s160 = ssub.s32 %s17, 1
        %s161 = sand.u32 %s72, 1
        %s162 = scalar_lea.sflag [#allocation5], %s161
        %s163 = sand.u32 %s72, 1
        %s164 = smul.addr %s163, 8
        %s165 = scalar_lea.vmem [#allocation4], %s164
        // Predicated region
        $region33: #{tpu_custom_call.1} parent=31 // pred_check
          %p166 = pneg %p85
        $region34: #{tpu_custom_call.1} parent=31 // pred_check_branch
          %168 = sbr.rel (%p166) target = $region36
        $region35: #{tpu_custom_call.1} parent=31 // pred_region
          %169 = dma.done %s162, 128
        $region36: #{tpu_custom_call.1} parent=31 // pred_fallthru
          _
        %p170 = pneg %p38
        %p171 = pneg %p35
        %p172 = pneg %p59
        %p173 = pneg %p56
        %s174 = sand.u32 %s72, 1
        %s175 = scalar_lea.sflag [#allocation5], %s174
        %s176 = sand.u32 %s72, 1
        %s177 = smul.addr %s176, 8
        %s178 = scalar_lea.vmem [#allocation4], %s177
        %p179 = pneg %p85
        %p180 = pneg %p82
        %p181 = pneg %p111
        %p182 = pneg %p108
        %s183 = sand.u32 %s98, 1
        %s184 = scalar_lea.sflag [#allocation6], %s183
        %s185 = sand.u32 %s98, 1
        %s186 = smul.addr %s185, 8
        %s187 = scalar_lea.vmem [#allocation7], %s186
        %v188 = vld [vmem:[%s165] sm:$0xff]
        %s189 = sld [smem:[#allocation2]]
        %s190 = sld [smem:[#allocation3]]
        %191 = vadd.xlane.f32.xlu0 %v188
        %v192 = vpop.xlane.xlu0 %191
        %v193 = vmul.f32 %v192, 0.0078125
        %v194 = vsub.f32 %v188, %v193
        %v195 = vmul.f32 %v194, %v194
        %196 = vadd.xlane.f32.xlu0 %v195
        %v197 = vpop.xlane.xlu0 %196
        %v198 = vmul.f32 %v197, 0.007874016
        %v199 = vrsqrt.pop %v198
        %v200 = vmul.f32 %v198, %v199
        %vm201 = vcmp.eq.f32.partialorder %v198, inf
        %v202 = vsel %vm201, %v198, %v200
        %vm203 = vcmp.eq.f32.partialorder %v198, 0.0
        %v204 = vand.u32 %v198, 2147483648
        %v205 = vsel %vm203, %v204, %v202
        %v206 = vadd.f32 %v205, 1e-06
        %v207 = vstv %s189
        %v208 = vrcp.pop %v206
        %v209 = vmul.f32 %v207, %v208
        %v210 = vmul.f32 %v194, %v209
        %v211 = vstv %s190
        %v212 = vadd.f32 %v210, %v211
        %213 = vst [vmem:[%s187] sm:$0xff] %v212
        %s214 = sand.u32 %s98, 1
        %s215 = scalar_lea.sflag [#allocation6], %s214
        %s216 = sand.u32 %s98, 1
        %s217 = smul.addr %s216, 8
        %s218 = scalar_lea.vmem [#allocation7], %s217
        // Predicated region
        $region37: #{tpu_custom_call.1} parent=31 // pred_check
          %p219 = pneg %p108
        $region38: #{tpu_custom_call.1} parent=31 // pred_check_branch
          %221 = sbr.rel (%p219) target = $region40
        $region39: #{tpu_custom_call.1} parent=31 // pred_region
          %s223 = ssub.s32 128, 128
          %224 = vsyncadd %s215, %s223
          %s225 = smul.addr %s22, 128
          %s226 = scalar_lea.hbm %s3, %s225
          %s228 = sshll.u32 %s218, 4
          %s229 = int_to_ptr.vmem [resolvable:$true] %s228
          %231 = dma.vmem_to_hbm [thread:$0]  %s229, 128, %s226, %s215
        $region40: #{tpu_custom_call.1} parent=31 // pred_fallthru
          _
      $region32: #{tpu_custom_call.1} parent=5 // pred_fallthru
        _
      %p232 = scmp.le.s32.totalorder 2, %s17
      // Predicated region
      $region41: #{tpu_custom_call.1} parent=5 // pred_check
        %p233 = pneg %p232
      $region42: #{tpu_custom_call.1} parent=5 // pred_check_branch
        %235 = sbr.rel (%p233) target = $region44
      $region43: #{tpu_custom_call.1} parent=5 // pred_region
        %s236 = ssub.s32 %s17, 2
        // Predicated region
        $region45: #{tpu_custom_call.1} parent=43 // pred_check
          %p237 = pneg %p114
        $region46: #{tpu_custom_call.1} parent=43 // pred_check_branch
          %239 = sbr.rel (%p237) target = $region48
        $region47: #{tpu_custom_call.1} parent=43 // pred_region
          %s240 = sand.u32 %s99, 1
          %s241 = scalar_lea.sflag [#allocation6], %s240
          %s242 = sand.u32 %s99, 1
          %s243 = smul.addr %s242, 8
          %s244 = scalar_lea.vmem [#allocation7], %s243
          %245 = dma.done %s241, 128
        $region48: #{tpu_custom_call.1} parent=43 // pred_fallthru
          _
      $region44: #{tpu_custom_call.1} parent=5 // pred_fallthru
        _
    $region6: #{tpu_custom_call.1} parent=1 // loop_footer
      %s21 = sadd.s32 1, %s17
    $region7: #{tpu_custom_call.1} parent=1 // loop_footer_branch
      %16 = sbr.rel target = $region3
    $region8: #{tpu_custom_call.1} parent=1 // loop_exit
      _
    %246 = vsyncpa [#allocation5], 1
    %s247 = scalar_lea.sflag [#allocation5], 1
    %248 = vsyncpa %s247, 1
    %249 = vsyncpa [#allocation6], 1
    %s250 = scalar_lea.sflag [#allocation6], 1
    %251 = vsyncpa %s250, 1

</llo_original>
